<compile_context>
chip_gen: v5e
topology: v5e:2x2
jax: 0.10.0
libtpu: 0.0.40
codegen_flags: <defaults>
</compile_context>

<pallas_src>
import math

import jax
import jax.numpy as jnp
from jax.experimental import pallas as pl
from jax.experimental.pallas import tpu as pltpu

EPS = 1e-5  # PyTorch BatchNorm default eps

NUM_LAYERS = 3
IN_CHANNELS = 16
HIDDEN_CHANNELS = 32
OUT_CHANNELS = 32
NUM_CLASSES = 4
EMBD_DIM = HIDDEN_CHANNELS * (NUM_LAYERS - 1) + OUT_CHANNELS  # 96


def _vmem():
    return pl.BlockSpec(memory_space=pltpu.MemorySpace.VMEM)


# --------------------------------------------------------------------------
# Single fused Pallas kernel for the full forward pass
# --------------------------------------------------------------------------
def fused_gnn_kernel(a_ref, pool_ref, x_ref, w0_ref, b0_ref, *rest):
    """Fused forward:

        h      = relu(x @ W0' + b0')                       (BN folded into W0)
        for each layer i:
          h    = relu(A_hat @ (h @ Wi') + bi')             (BN folded into Wi)
          e_i  = relu((pool @ h) * es_i + eb_i)            (BN_embd as scale/shift)
        logits = sum_i e_i @ Wl[rows_i] + bl               (== concat(e) @ Wl + bl)
    """
    layer_refs = rest[:4 * NUM_LAYERS]          # (w, b, es, eb) per layer
    wl_ref, bl_ref, out_ref = rest[4 * NUM_LAYERS:]

    a = a_ref[...]       # [N, N]  bf16, resident across all layers
    p = pool_ref[...]    # [G, N]  bf16, resident across all layers

    # lin_start (+ folded bn_start) + ReLU
    h = jnp.dot(x_ref[...], w0_ref[...],
                preferred_element_type=jnp.float32) + b0_ref[...]
    h = jnp.maximum(h, 0.0)

    logits = jnp.zeros(out_ref.shape, jnp.float32)
    for i in range(NUM_LAYERS):
        w_ref, b_ref, es_ref, eb_ref = layer_refs[4 * i:4 * i + 4]

        # (X @ W) first, then A_hat @ (XW): N^2 matmul runs at output width.
        xw = jnp.dot(h.astype(jnp.bfloat16), w_ref[...],
                     preferred_element_type=jnp.float32)
        h = jnp.dot(a, xw.astype(jnp.bfloat16),
                    preferred_element_type=jnp.float32) + b_ref[...]
        h = jnp.maximum(h, 0.0)

        # global_add_pool + folded BN_embd + ReLU (dropout = identity).
        pooled = jnp.dot(p, h.astype(jnp.bfloat16),
                         preferred_element_type=jnp.float32)
        e = jnp.maximum(pooled * es_ref[...] + eb_ref[...], 0.0)

        # Partial final-linear for this layer's embd slice (replaces concat).
        cout = e.shape[1]
        off = i * HIDDEN_CHANNELS
        logits = logits + jnp.dot(e, wl_ref[off:off + cout, :],
                                  preferred_element_type=jnp.float32)

    out_ref[...] = logits + bl_ref[...]


# --------------------------------------------------------------------------
# Parameter init (deterministic, PyTorch-style uniform for Linear layers)
# --------------------------------------------------------------------------
def init_linear(key, fan_in, fan_out):
    k1, k2 = jax.random.split(key)
    bound = 1.0 / math.sqrt(fan_in)
    # stored as [in, out] (already transposed vs torch's [out, in])
    w = jax.random.uniform(k1, (fan_in, fan_out), jnp.float32, -bound, bound)
    b = jax.random.uniform(k2, (1, fan_out), jnp.float32, -bound, bound)
    return w, b


def init_bn(channels):
    # PyTorch BatchNorm1d.reset_parameters(): gamma=1, beta=0, mean=0, var=1
    return (jnp.ones((1, channels), jnp.float32),
            jnp.zeros((1, channels), jnp.float32),
            jnp.zeros((1, channels), jnp.float32),
            jnp.ones((1, channels), jnp.float32))


def init_gnn_pred_params(key):
    keys = jax.random.split(key, NUM_LAYERS + 2)
    params = {}
    params["lin_start"] = init_linear(keys[0], IN_CHANNELS, HIDDEN_CHANNELS)
    params["bn_start"] = init_bn(HIDDEN_CHANNELS)

    conv_dims = [(HIDDEN_CHANNELS, HIDDEN_CHANNELS)] * (NUM_LAYERS - 1) \
        + [(HIDDEN_CHANNELS, OUT_CHANNELS)]
    params["convs"] = [init_linear(keys[1 + i], cin, cout)
                       for i, (cin, cout) in enumerate(conv_dims)]
    params["bns"] = [init_bn(cout) for (_, cout) in conv_dims]
    params["bns_embd"] = [init_bn(cout) for (_, cout) in conv_dims]

    params["lin"] = init_linear(keys[-1], EMBD_DIM, NUM_CLASSES)
    return params


# --------------------------------------------------------------------------
# BN folding helpers (inference mode: y -> y*s + t)
# --------------------------------------------------------------------------
def _bn_scale_shift(gamma, beta, mu, var):
    s = gamma * jax.lax.rsqrt(var + EPS)
    t = beta - mu * s
    return s, t


def _fold_bn_into_linear(w, b, gamma, beta, mu, var):
    s, t = _bn_scale_shift(gamma, beta, mu, var)
    return w * s, b * s + t


# --------------------------------------------------------------------------
# Forward pass: one fused pallas_call
# --------------------------------------------------------------------------
def gnn_pred_forward(params, x, edge_index, batch, num_graphs):
    n = x.shape[0]
    # dense GCN-normalized adjacency with self-loops: D^-1/2 (A + I) D^-1/2
    adj = jnp.zeros((n, n), jnp.float32).at[edge_index[1],
                                            edge_index[0]].add(1.0)
    adj = adj + jnp.eye(n, dtype=jnp.float32)
    deg = adj.sum(axis=1)
    dinv = jax.lax.rsqrt(deg)            # deg >= 1 thanks to self-loops
    a_hat = (dinv[:, None] * adj * dinv[None, :]).astype(jnp.bfloat16)

    # global_add_pool as one-hot batch-assignment matmul P[G, N]
    pool = jax.nn.one_hot(batch, num_graphs,
                          dtype=jnp.float32).T.astype(jnp.bfloat16)

    # Fold BN into preceding linears at trace time.
    w0, b0 = params["lin_start"]
    w0f, b0f = _fold_bn_into_linear(w0, b0, *params["bn_start"])

    operands = [a_hat, pool, x.astype(jnp.bfloat16),
                w0f.astype(jnp.bfloat16), b0f]
    for i in range(NUM_LAYERS):
        w, b = params["convs"][i]
        wf, bf = _fold_bn_into_linear(w, b, *params["bns"][i])
        es, eb = _bn_scale_shift(*params["bns_embd"][i])
        operands += [wf.astype(jnp.bfloat16), bf, es, eb]
    wl, bl = params["lin"]
    operands += [wl, bl]

    return pl.pallas_call(
        fused_gnn_kernel,
        out_shape=jax.ShapeDtypeStruct((num_graphs, NUM_CLASSES), jnp.float32),
        in_specs=[_vmem() for _ in operands],
        out_specs=_vmem(),
    )(*operands)


# --------------------------------------------------------------------------
# Pure-JAX reference (unfolded, f32) for a numerical sanity check
# --------------------------------------------------------------------------
def gnn_pred_reference(params, x, edge_index, batch, num_graphs):
    n = x.shape[0]
    adj = jnp.zeros((n, n), jnp.float32).at[edge_index[1],
                                            edge_index[0]].add(1.0)
    adj = adj + jnp.eye(n, dtype=jnp.float32)
    dinv = jax.lax.rsqrt(adj.sum(axis=1))
    a_hat = dinv[:, None] * adj * dinv[None, :]
    pool = jax.nn.one_hot(batch, num_graphs, dtype=jnp.float32).T

    def bn(v, p):
        g, be, mu, var = p
        return (v - mu) * jax.lax.rsqrt(var + EPS) * g + be

    w0, b0 = params["lin_start"]
    h = jnp.maximum(bn(x @ w0 + b0, params["bn_start"]), 0.0)
    embds = []
    for i in range(NUM_LAYERS):
        w, b = params["convs"][i]
        h = jnp.maximum(bn(a_hat @ h @ w + b, params["bns"][i]), 0.0)
        e = jnp.maximum(bn(pool @ h, params["bns_embd"][i]), 0.0)
        embds.append(e)
    wl, bl = params["lin"]
    return jnp.concatenate(embds, axis=-1) @ wl + bl


# --------------------------------------------------------------------------
# Driver
# --------------------------------------------------------------------------
if __name__ == "__main__":
    key = jax.random.PRNGKey(0)
    k_param, k_x = jax.random.split(key)

    num_graphs = 3
    nodes_per_graph = 8
    num_nodes = num_graphs * nodes_per_graph  # 24

    # node features
    x = jax.random.normal(k_x, (num_nodes, IN_CHANNELS), jnp.float32)

    # batch assignment vector
    batch = jnp.repeat(jnp.arange(num_graphs, dtype=jnp.int32),
                       nodes_per_graph)

    # edge_index [2, E]: bidirectional chain within each graph
    src, dst = [], []
    for g in range(num_graphs):
        base = g * nodes_per_graph
        for j in range(nodes_per_graph - 1):
            src += [base + j, base + j + 1]
            dst += [base + j + 1, base + j]
    edge_index = jnp.array([src, dst], dtype=jnp.int32)

    params = init_gnn_pred_params(k_param)

    out = gnn_pred_forward(params, x, edge_index, batch, num_graphs)
    out = jax.block_until_ready(out)

    assert out.shape == (num_graphs, NUM_CLASSES)
    assert bool(jnp.all(jnp.isfinite(out)))

    # sanity check against the unfolded f32 reference (bf16 matmul tolerance)
    ref = gnn_pred_reference(params, x, edge_index, batch, num_graphs)
    assert bool(jnp.allclose(out, ref, rtol=5e-2, atol=5e-2))

    print("KERNEL_OK")
</pallas_src>

<mosaic_0001>
module attributes {stable_mosaic.version = 11 : i64} {
  func.func @fused_gnn_kernel(%arg0: memref<24x24xbf16, #tpu.memory_space<vmem>>, %arg1: memref<3x24xbf16, #tpu.memory_space<vmem>>, %arg2: memref<24x16xbf16, #tpu.memory_space<vmem>>, %arg3: memref<16x32xbf16, #tpu.memory_space<vmem>>, %arg4: memref<1x32xf32, #tpu.memory_space<vmem>>, %arg5: memref<32x32xbf16, #tpu.memory_space<vmem>>, %arg6: memref<1x32xf32, #tpu.memory_space<vmem>>, %arg7: memref<1x32xf32, #tpu.memory_space<vmem>>, %arg8: memref<1x32xf32, #tpu.memory_space<vmem>>, %arg9: memref<32x32xbf16, #tpu.memory_space<vmem>>, %arg10: memref<1x32xf32, #tpu.memory_space<vmem>>, %arg11: memref<1x32xf32, #tpu.memory_space<vmem>>, %arg12: memref<1x32xf32, #tpu.memory_space<vmem>>, %arg13: memref<32x32xbf16, #tpu.memory_space<vmem>>, %arg14: memref<1x32xf32, #tpu.memory_space<vmem>>, %arg15: memref<1x32xf32, #tpu.memory_space<vmem>>, %arg16: memref<1x32xf32, #tpu.memory_space<vmem>>, %arg17: memref<96x4xf32, #tpu.memory_space<vmem>>, %arg18: memref<1x4xf32, #tpu.memory_space<vmem>>, %arg19: memref<3x4xf32, #tpu.memory_space<vmem>>) attributes {dimension_semantics = [], scalar_prefetch = 0 : i64, scratch_operands = 0 : i64, tpu.core_type = #tpu.core_type<tc>} {
    %c0 = arith.constant 0 : index
    %c0_0 = arith.constant 0 : index
    %0 = vector.load %arg0[%c0, %c0_0] : memref<24x24xbf16, #tpu.memory_space<vmem>>, vector<24x24xbf16>
    %c0_1 = arith.constant 0 : index
    %c0_2 = arith.constant 0 : index
    %1 = vector.load %arg1[%c0_1, %c0_2] : memref<3x24xbf16, #tpu.memory_space<vmem>>, vector<3x24xbf16>
    %c0_3 = arith.constant 0 : index
    %c0_4 = arith.constant 0 : index
    %2 = vector.load %arg2[%c0_3, %c0_4] : memref<24x16xbf16, #tpu.memory_space<vmem>>, vector<24x16xbf16>
    %c0_5 = arith.constant 0 : index
    %c0_6 = arith.constant 0 : index
    %3 = vector.load %arg3[%c0_5, %c0_6] : memref<16x32xbf16, #tpu.memory_space<vmem>>, vector<16x32xbf16>
    %cst = arith.constant dense<0.000000e+00> : vector<24x32xf32>
    %4 = tpu.matmul %2, %3, %cst {dimension_numbers = #tpu.dot_dimension_numbers<[1], [0], [0], [1], [0, 0, 1, 1], [], []>} : vector<24x16xbf16>, vector<16x32xbf16>, vector<24x32xf32> -> vector<24x32xf32>
    %c0_7 = arith.constant 0 : index
    %c0_8 = arith.constant 0 : index
    %5 = vector.load %arg4[%c0_7, %c0_8] : memref<1x32xf32, #tpu.memory_space<vmem>>, vector<1x32xf32>
    %6 = vector.broadcast %5 : vector<1x32xf32> to vector<24x32xf32>
    %7 = arith.addf %4, %6 : vector<24x32xf32>
    %cst_9 = arith.constant 0.000000e+00 : f32
    %8 = vector.broadcast %cst_9 : f32 to vector<24x32xf32>
    %9 = arith.maximumf %7, %8 : vector<24x32xf32>
    %cst_10 = arith.constant 0.000000e+00 : f32
    %10 = vector.broadcast %cst_10 : f32 to vector<3x4xf32>
    %11 = arith.truncf %9 : vector<24x32xf32> to vector<24x32xbf16>
    %c0_11 = arith.constant 0 : index
    %c0_12 = arith.constant 0 : index
    %12 = vector.load %arg5[%c0_11, %c0_12] : memref<32x32xbf16, #tpu.memory_space<vmem>>, vector<32x32xbf16>
    %cst_13 = arith.constant dense<0.000000e+00> : vector<24x32xf32>
    %13 = tpu.matmul %11, %12, %cst_13 {dimension_numbers = #tpu.dot_dimension_numbers<[1], [0], [0], [1], [0, 0, 1, 1], [], []>} : vector<24x32xbf16>, vector<32x32xbf16>, vector<24x32xf32> -> vector<24x32xf32>
    %14 = arith.truncf %13 : vector<24x32xf32> to vector<24x32xbf16>
    %cst_14 = arith.constant dense<0.000000e+00> : vector<24x32xf32>
    %15 = tpu.matmul %0, %14, %cst_14 {dimension_numbers = #tpu.dot_dimension_numbers<[1], [0], [0], [1], [0, 0, 1, 1], [], []>} : vector<24x24xbf16>, vector<24x32xbf16>, vector<24x32xf32> -> vector<24x32xf32>
    %c0_15 = arith.constant 0 : index
    %c0_16 = arith.constant 0 : index
    %16 = vector.load %arg6[%c0_15, %c0_16] : memref<1x32xf32, #tpu.memory_space<vmem>>, vector<1x32xf32>
    %17 = vector.broadcast %16 : vector<1x32xf32> to vector<24x32xf32>
    %18 = arith.addf %15, %17 : vector<24x32xf32>
    %cst_17 = arith.constant 0.000000e+00 : f32
    %19 = vector.broadcast %cst_17 : f32 to vector<24x32xf32>
    %20 = arith.maximumf %18, %19 : vector<24x32xf32>
    %21 = arith.truncf %20 : vector<24x32xf32> to vector<24x32xbf16>
    %cst_18 = arith.constant dense<0.000000e+00> : vector<3x32xf32>
    %22 = tpu.matmul %1, %21, %cst_18 {dimension_numbers = #tpu.dot_dimension_numbers<[1], [0], [0], [1], [0, 0, 1, 1], [], []>} : vector<3x24xbf16>, vector<24x32xbf16>, vector<3x32xf32> -> vector<3x32xf32>
    %c0_19 = arith.constant 0 : index
    %c0_20 = arith.constant 0 : index
    %23 = vector.load %arg7[%c0_19, %c0_20] : memref<1x32xf32, #tpu.memory_space<vmem>>, vector<1x32xf32>
    %24 = vector.broadcast %23 : vector<1x32xf32> to vector<3x32xf32>
    %25 = arith.mulf %22, %24 : vector<3x32xf32>
    %c0_21 = arith.constant 0 : index
    %c0_22 = arith.constant 0 : index
    %26 = vector.load %arg8[%c0_21, %c0_22] : memref<1x32xf32, #tpu.memory_space<vmem>>, vector<1x32xf32>
    %27 = vector.broadcast %26 : vector<1x32xf32> to vector<3x32xf32>
    %28 = arith.addf %25, %27 : vector<3x32xf32>
    %cst_23 = arith.constant 0.000000e+00 : f32
    %29 = vector.broadcast %cst_23 : f32 to vector<3x32xf32>
    %30 = arith.maximumf %28, %29 : vector<3x32xf32>
    %c0_24 = arith.constant 0 : index
    %c0_25 = arith.constant 0 : index
    %31 = vector.load %arg17[%c0_24, %c0_25] : memref<96x4xf32, #tpu.memory_space<vmem>>, vector<32x4xf32>
    %cst_26 = arith.constant dense<0.000000e+00> : vector<3x4xf32>
    %32 = tpu.matmul %30, %31, %cst_26 {dimension_numbers = #tpu.dot_dimension_numbers<[1], [0], [0], [1], [0, 0, 1, 1], [], []>} : vector<3x32xf32>, vector<32x4xf32>, vector<3x4xf32> -> vector<3x4xf32>
    %33 = arith.addf %10, %32 : vector<3x4xf32>
    %34 = arith.truncf %20 : vector<24x32xf32> to vector<24x32xbf16>
    %c0_27 = arith.constant 0 : index
    %c0_28 = arith.constant 0 : index
    %35 = vector.load %arg9[%c0_27, %c0_28] : memref<32x32xbf16, #tpu.memory_space<vmem>>, vector<32x32xbf16>
    %cst_29 = arith.constant dense<0.000000e+00> : vector<24x32xf32>
    %36 = tpu.matmul %34, %35, %cst_29 {dimension_numbers = #tpu.dot_dimension_numbers<[1], [0], [0], [1], [0, 0, 1, 1], [], []>} : vector<24x32xbf16>, vector<32x32xbf16>, vector<24x32xf32> -> vector<24x32xf32>
    %37 = arith.truncf %36 : vector<24x32xf32> to vector<24x32xbf16>
    %cst_30 = arith.constant dense<0.000000e+00> : vector<24x32xf32>
    %38 = tpu.matmul %0, %37, %cst_30 {dimension_numbers = #tpu.dot_dimension_numbers<[1], [0], [0], [1], [0, 0, 1, 1], [], []>} : vector<24x24xbf16>, vector<24x32xbf16>, vector<24x32xf32> -> vector<24x32xf32>
    %c0_31 = arith.constant 0 : index
    %c0_32 = arith.constant 0 : index
    %39 = vector.load %arg10[%c0_31, %c0_32] : memref<1x32xf32, #tpu.memory_space<vmem>>, vector<1x32xf32>
    %40 = vector.broadcast %39 : vector<1x32xf32> to vector<24x32xf32>
    %41 = arith.addf %38, %40 : vector<24x32xf32>
    %cst_33 = arith.constant 0.000000e+00 : f32
    %42 = vector.broadcast %cst_33 : f32 to vector<24x32xf32>
    %43 = arith.maximumf %41, %42 : vector<24x32xf32>
    %44 = arith.truncf %43 : vector<24x32xf32> to vector<24x32xbf16>
    %cst_34 = arith.constant dense<0.000000e+00> : vector<3x32xf32>
    %45 = tpu.matmul %1, %44, %cst_34 {dimension_numbers = #tpu.dot_dimension_numbers<[1], [0], [0], [1], [0, 0, 1, 1], [], []>} : vector<3x24xbf16>, vector<24x32xbf16>, vector<3x32xf32> -> vector<3x32xf32>
    %c0_35 = arith.constant 0 : index
    %c0_36 = arith.constant 0 : index
    %46 = vector.load %arg11[%c0_35, %c0_36] : memref<1x32xf32, #tpu.memory_space<vmem>>, vector<1x32xf32>
    %47 = vector.broadcast %46 : vector<1x32xf32> to vector<3x32xf32>
    %48 = arith.mulf %45, %47 : vector<3x32xf32>
    %c0_37 = arith.constant 0 : index
    %c0_38 = arith.constant 0 : index
    %49 = vector.load %arg12[%c0_37, %c0_38] : memref<1x32xf32, #tpu.memory_space<vmem>>, vector<1x32xf32>
    %50 = vector.broadcast %49 : vector<1x32xf32> to vector<3x32xf32>
    %51 = arith.addf %48, %50 : vector<3x32xf32>
    %cst_39 = arith.constant 0.000000e+00 : f32
    %52 = vector.broadcast %cst_39 : f32 to vector<3x32xf32>
    %53 = arith.maximumf %51, %52 : vector<3x32xf32>
    %c32 = arith.constant 32 : index
    %c0_40 = arith.constant 0 : index
    %54 = vector.load %arg17[%c32, %c0_40] : memref<96x4xf32, #tpu.memory_space<vmem>>, vector<32x4xf32>
    %cst_41 = arith.constant dense<0.000000e+00> : vector<3x4xf32>
    %55 = tpu.matmul %53, %54, %cst_41 {dimension_numbers = #tpu.dot_dimension_numbers<[1], [0], [0], [1], [0, 0, 1, 1], [], []>} : vector<3x32xf32>, vector<32x4xf32>, vector<3x4xf32> -> vector<3x4xf32>
    %56 = arith.addf %33, %55 : vector<3x4xf32>
    %57 = arith.truncf %43 : vector<24x32xf32> to vector<24x32xbf16>
    %c0_42 = arith.constant 0 : index
    %c0_43 = arith.constant 0 : index
    %58 = vector.load %arg13[%c0_42, %c0_43] : memref<32x32xbf16, #tpu.memory_space<vmem>>, vector<32x32xbf16>
    %cst_44 = arith.constant dense<0.000000e+00> : vector<24x32xf32>
    %59 = tpu.matmul %57, %58, %cst_44 {dimension_numbers = #tpu.dot_dimension_numbers<[1], [0], [0], [1], [0, 0, 1, 1], [], []>} : vector<24x32xbf16>, vector<32x32xbf16>, vector<24x32xf32> -> vector<24x32xf32>
    %60 = arith.truncf %59 : vector<24x32xf32> to vector<24x32xbf16>
    %cst_45 = arith.constant dense<0.000000e+00> : vector<24x32xf32>
    %61 = tpu.matmul %0, %60, %cst_45 {dimension_numbers = #tpu.dot_dimension_numbers<[1], [0], [0], [1], [0, 0, 1, 1], [], []>} : vector<24x24xbf16>, vector<24x32xbf16>, vector<24x32xf32> -> vector<24x32xf32>
    %c0_46 = arith.constant 0 : index
    %c0_47 = arith.constant 0 : index
    %62 = vector.load %arg14[%c0_46, %c0_47] : memref<1x32xf32, #tpu.memory_space<vmem>>, vector<1x32xf32>
    %63 = vector.broadcast %62 : vector<1x32xf32> to vector<24x32xf32>
    %64 = arith.addf %61, %63 : vector<24x32xf32>
    %cst_48 = arith.constant 0.000000e+00 : f32
    %65 = vector.broadcast %cst_48 : f32 to vector<24x32xf32>
    %66 = arith.maximumf %64, %65 : vector<24x32xf32>
    %67 = arith.truncf %66 : vector<24x32xf32> to vector<24x32xbf16>
    %cst_49 = arith.constant dense<0.000000e+00> : vector<3x32xf32>
    %68 = tpu.matmul %1, %67, %cst_49 {dimension_numbers = #tpu.dot_dimension_numbers<[1], [0], [0], [1], [0, 0, 1, 1], [], []>} : vector<3x24xbf16>, vector<24x32xbf16>, vector<3x32xf32> -> vector<3x32xf32>
    %c0_50 = arith.constant 0 : index
    %c0_51 = arith.constant 0 : index
    %69 = vector.load %arg15[%c0_50, %c0_51] : memref<1x32xf32, #tpu.memory_space<vmem>>, vector<1x32xf32>
    %70 = vector.broadcast %69 : vector<1x32xf32> to vector<3x32xf32>
    %71 = arith.mulf %68, %70 : vector<3x32xf32>
    %c0_52 = arith.constant 0 : index
    %c0_53 = arith.constant 0 : index
    %72 = vector.load %arg16[%c0_52, %c0_53] : memref<1x32xf32, #tpu.memory_space<vmem>>, vector<1x32xf32>
    %73 = vector.broadcast %72 : vector<1x32xf32> to vector<3x32xf32>
    %74 = arith.addf %71, %73 : vector<3x32xf32>
    %cst_54 = arith.constant 0.000000e+00 : f32
    %75 = vector.broadcast %cst_54 : f32 to vector<3x32xf32>
    %76 = arith.maximumf %74, %75 : vector<3x32xf32>
    %c64 = arith.constant 64 : index
    %c0_55 = arith.constant 0 : index
    %77 = vector.load %arg17[%c64, %c0_55] : memref<96x4xf32, #tpu.memory_space<vmem>>, vector<32x4xf32>
    %cst_56 = arith.constant dense<0.000000e+00> : vector<3x4xf32>
    %78 = tpu.matmul %76, %77, %cst_56 {dimension_numbers = #tpu.dot_dimension_numbers<[1], [0], [0], [1], [0, 0, 1, 1], [], []>} : vector<3x32xf32>, vector<32x4xf32>, vector<3x4xf32> -> vector<3x4xf32>
    %79 = arith.addf %56, %78 : vector<3x4xf32>
    %c0_57 = arith.constant 0 : index
    %c0_58 = arith.constant 0 : index
    %80 = vector.load %arg18[%c0_57, %c0_58] : memref<1x4xf32, #tpu.memory_space<vmem>>, vector<1x4xf32>
    %81 = vector.broadcast %80 : vector<1x4xf32> to vector<3x4xf32>
    %82 = arith.addf %79, %81 : vector<3x4xf32>
    %c0_59 = arith.constant 0 : index
    %c0_60 = arith.constant 0 : index
    %83 = vector.load %arg19[%c0_59, %c0_60] : memref<3x4xf32, #tpu.memory_space<vmem>>, vector<3x4xf32>
    tpu.vector_store %arg19[%c0_59, %c0_60], %82 {strides = array<i32>} : memref<3x4xf32, #tpu.memory_space<vmem>>, vector<3x4xf32>,
    return
  }
}

</mosaic_0001>

<llo_original>
// kernel: tpu_custom_call.1
$region0: #{tpu_custom_call.1}
  #allocation0 [shape = 'u32[]', space=smem, size = 0x4, offset = 0x4, fixed_abs, tag = 'smem constant byte address 0x4 - core index']
  #allocation1 [shape = 'u32[72,128]{1,0:T(1,128)}', space=vmem, size = 0x9000, scoped, tag = 'internal scratch']
  %s0 = inlined_call_operand.vmem [shape: bf16[24,24], index: 0, kind: input, shape index: {}]
  %s1 = inlined_call_operand.vmem [shape: bf16[3,24], index: 1, kind: input, shape index: {}]
  %s2 = inlined_call_operand.vmem [shape: bf16[24,16], index: 2, kind: input, shape index: {}]
  %s3 = inlined_call_operand.vmem [shape: bf16[16,32], index: 3, kind: input, shape index: {}]
  %s4 = inlined_call_operand.vmem [shape: f32[1,32], index: 4, kind: input, shape index: {}]
  %s5 = inlined_call_operand.vmem [shape: bf16[32,32], index: 5, kind: input, shape index: {}]
  %s6 = inlined_call_operand.vmem [shape: f32[1,32], index: 6, kind: input, shape index: {}]
  %s7 = inlined_call_operand.vmem [shape: f32[1,32], index: 7, kind: input, shape index: {}]
  %s8 = inlined_call_operand.vmem [shape: f32[1,32], index: 8, kind: input, shape index: {}]
  %s9 = inlined_call_operand.vmem [shape: bf16[32,32], index: 9, kind: input, shape index: {}]
  %s10 = inlined_call_operand.vmem [shape: f32[1,32], index: 10, kind: input, shape index: {}]
  %s11 = inlined_call_operand.vmem [shape: f32[1,32], index: 11, kind: input, shape index: {}]
  %s12 = inlined_call_operand.vmem [shape: f32[1,32], index: 12, kind: input, shape index: {}]
  %s13 = inlined_call_operand.vmem [shape: bf16[32,32], index: 13, kind: input, shape index: {}]
  %s14 = inlined_call_operand.vmem [shape: f32[1,32], index: 14, kind: input, shape index: {}]
  %s15 = inlined_call_operand.vmem [shape: f32[1,32], index: 15, kind: input, shape index: {}]
  %s16 = inlined_call_operand.vmem [shape: f32[1,32], index: 16, kind: input, shape index: {}]
  %s17 = inlined_call_operand.vmem [shape: f32[96,4], index: 17, kind: input, shape index: {}]
  %s18 = inlined_call_operand.vmem [shape: f32[1,4], index: 18, kind: input, shape index: {}]
  %s19 = inlined_call_operand.hbm [shape: f32[3,4], index: 19, kind: output, shape index: {}]
  %s20 = sld [smem:[#allocation0]]
  $region86: #{tpu_custom_call.1} parent=0
    _
  %s22 = ssub.s32 1, %s20
  %s23 = scalar_select 0, %s22, %s20
  $region1: #{tpu_custom_call.1} parent=0
    #allocation2 [shape = 'u8[2048]{0}', space=vmem, size = 0x800, scoped, tag = 'output window, operand 0, single buffered']
    #allocation3 [shape = 's32[1]{0}', space=sflag, size = 0x4, scoped, tag = 'scoped memory for tpu_custom_call.1']
    %24 = vsyncpa [#allocation3], 0
    // Predicated region
    $region2: #{tpu_custom_call.1} parent=1 // pred_check
      _
    $region3: #{tpu_custom_call.1} parent=1 // pred_check_branch
      %26 = sbr.rel (0) target = $region5
    $region4: #{tpu_custom_call.1} parent=1 // pred_region
      _
    $region5: #{tpu_custom_call.1} parent=1 // pred_fallthru
      _
    // Predicated region
    $region6: #{tpu_custom_call.1} parent=1 // pred_check
      _
    $region7: #{tpu_custom_call.1} parent=1 // pred_check_branch
      %28 = sbr.rel (0) target = $region9
    $region8: #{tpu_custom_call.1} parent=1 // pred_region
      _
    $region9: #{tpu_custom_call.1} parent=1 // pred_fallthru
      _
    // Predicated region
    $region10: #{tpu_custom_call.1} parent=1 // pred_check
      _
    $region11: #{tpu_custom_call.1} parent=1 // pred_check_branch
      %30 = sbr.rel (0) target = $region13
    $region12: #{tpu_custom_call.1} parent=1 // pred_region
      _
    $region13: #{tpu_custom_call.1} parent=1 // pred_fallthru
      _
    // Predicated region
    $region14: #{tpu_custom_call.1} parent=1 // pred_check
      _
    $region15: #{tpu_custom_call.1} parent=1 // pred_check_branch
      %32 = sbr.rel (0) target = $region17
    $region16: #{tpu_custom_call.1} parent=1 // pred_region
      _
    $region17: #{tpu_custom_call.1} parent=1 // pred_fallthru
      _
    // Predicated region
    $region18: #{tpu_custom_call.1} parent=1 // pred_check
      _
    $region19: #{tpu_custom_call.1} parent=1 // pred_check_branch
      %34 = sbr.rel (0) target = $region21
    $region20: #{tpu_custom_call.1} parent=1 // pred_region
      _
    $region21: #{tpu_custom_call.1} parent=1 // pred_fallthru
      _
    // Predicated region
    $region22: #{tpu_custom_call.1} parent=1 // pred_check
      _
    $region23: #{tpu_custom_call.1} parent=1 // pred_check_branch
      %36 = sbr.rel (0) target = $region25
    $region24: #{tpu_custom_call.1} parent=1 // pred_region
      _
    $region25: #{tpu_custom_call.1} parent=1 // pred_fallthru
      _
    // Predicated region
    $region26: #{tpu_custom_call.1} parent=1 // pred_check
      _
    $region27: #{tpu_custom_call.1} parent=1 // pred_check_branch
      %38 = sbr.rel (0) target = $region29
    $region28: #{tpu_custom_call.1} parent=1 // pred_region
      _
    $region29: #{tpu_custom_call.1} parent=1 // pred_fallthru
      _
    // Predicated region
    $region30: #{tpu_custom_call.1} parent=1 // pred_check
      _
    $region31: #{tpu_custom_call.1} parent=1 // pred_check_branch
      %40 = sbr.rel (0) target = $region33
    $region32: #{tpu_custom_call.1} parent=1 // pred_region
      _
    $region33: #{tpu_custom_call.1} parent=1 // pred_fallthru
      _
    // Predicated region
    $region34: #{tpu_custom_call.1} parent=1 // pred_check
      _
    $region35: #{tpu_custom_call.1} parent=1 // pred_check_branch
      %42 = sbr.rel (0) target = $region37
    $region36: #{tpu_custom_call.1} parent=1 // pred_region
      _
    $region37: #{tpu_custom_call.1} parent=1 // pred_fallthru
      _
    // Predicated region
    $region38: #{tpu_custom_call.1} parent=1 // pred_check
      _
    $region39: #{tpu_custom_call.1} parent=1 // pred_check_branch
      %44 = sbr.rel (0) target = $region41
    $region40: #{tpu_custom_call.1} parent=1 // pred_region
      _
    $region41: #{tpu_custom_call.1} parent=1 // pred_fallthru
      _
    // Predicated region
    $region42: #{tpu_custom_call.1} parent=1 // pred_check
      _
    $region43: #{tpu_custom_call.1} parent=1 // pred_check_branch
      %46 = sbr.rel (0) target = $region45
    $region44: #{tpu_custom_call.1} parent=1 // pred_region
      _
    $region45: #{tpu_custom_call.1} parent=1 // pred_fallthru
      _
    // Predicated region
    $region46: #{tpu_custom_call.1} parent=1 // pred_check
      _
    $region47: #{tpu_custom_call.1} parent=1 // pred_check_branch
      %48 = sbr.rel (0) target = $region49
    $region48: #{tpu_custom_call.1} parent=1 // pred_region
      _
    $region49: #{tpu_custom_call.1} parent=1 // pred_fallthru
      _
    // Predicated region
    $region50: #{tpu_custom_call.1} parent=1 // pred_check
      _
    $region51: #{tpu_custom_call.1} parent=1 // pred_check_branch
      %50 = sbr.rel (0) target = $region53
    $region52: #{tpu_custom_call.1} parent=1 // pred_region
      _
    $region53: #{tpu_custom_call.1} parent=1 // pred_fallthru
      _
    // Predicated region
    $region54: #{tpu_custom_call.1} parent=1 // pred_check
      _
    $region55: #{tpu_custom_call.1} parent=1 // pred_check_branch
      %52 = sbr.rel (0) target = $region57
    $region56: #{tpu_custom_call.1} parent=1 // pred_region
      _
    $region57: #{tpu_custom_call.1} parent=1 // pred_fallthru
      _
    // Predicated region
    $region58: #{tpu_custom_call.1} parent=1 // pred_check
      _
    $region59: #{tpu_custom_call.1} parent=1 // pred_check_branch
      %54 = sbr.rel (0) target = $region61
    $region60: #{tpu_custom_call.1} parent=1 // pred_region
      _
    $region61: #{tpu_custom_call.1} parent=1 // pred_fallthru
      _
    // Predicated region
    $region62: #{tpu_custom_call.1} parent=1 // pred_check
      _
    $region63: #{tpu_custom_call.1} parent=1 // pred_check_branch
      %56 = sbr.rel (0) target = $region65
    $region64: #{tpu_custom_call.1} parent=1 // pred_region
      _
    $region65: #{tpu_custom_call.1} parent=1 // pred_fallthru
      _
    // Predicated region
    $region66: #{tpu_custom_call.1} parent=1 // pred_check
      _
    $region67: #{tpu_custom_call.1} parent=1 // pred_check_branch
      %58 = sbr.rel (0) target = $region69
    $region68: #{tpu_custom_call.1} parent=1 // pred_region
      _
    $region69: #{tpu_custom_call.1} parent=1 // pred_fallthru
      _
    // Predicated region
    $region70: #{tpu_custom_call.1} parent=1 // pred_check
      _
    $region71: #{tpu_custom_call.1} parent=1 // pred_check_branch
      %60 = sbr.rel (0) target = $region73
    $region72: #{tpu_custom_call.1} parent=1 // pred_region
      _
    $region73: #{tpu_custom_call.1} parent=1 // pred_fallthru
      _
    // Predicated region
    $region74: #{tpu_custom_call.1} parent=1 // pred_check
      _
    $region75: #{tpu_custom_call.1} parent=1 // pred_check_branch
      %62 = sbr.rel (0) target = $region77
    $region76: #{tpu_custom_call.1} parent=1 // pred_region
      _
    $region77: #{tpu_custom_call.1} parent=1 // pred_fallthru
      _
    %v64 = vld [vmem:[%s0] sm:$0xf]
    %v65 = vld [vmem:[%s0 + $0x4] sm:$0xf]
    %v66 = vld [vmem:[%s0 + $0x8] sm:$0xf]
    %v67 = vld [vmem:[%s1] sm:$0x3]
    %v68 = vld [vmem:[%s2] sm:$0xf]
    %v69 = vld [vmem:[%s2 + $0x4] sm:$0xf]
    %v70 = vld [vmem:[%s2 + $0x8] sm:$0xf]
    %v71 = vld [vmem:[%s3] sm:$0xf]
    %v72 = vld [vmem:[%s3 + $0x4] sm:$0xf]
    %v73 = vld [vmem:[%s4] sm:$0x1]
    %v75 = vperm.slane %v73, 0
    %v80 = vunpack.c.l.b16 %v68
    %v81 = vunpack.c.l.b16 %v69
    %v82 = vunpack.c.l.b16 %v70
    %v83 = vpack.c.b16 %v81, %v80
    %v84 = vpack.c.b16 %v82, %v82
    %v87 = vunpack.c.l.b16 %v71
    %v88 = vunpack.c.l.b16 %v72
    %v89 = vpack.c.b16 %v88, %v87
    %vm91 = vcmask 130048
    %v93 = vsel %vm91, %v83, 0
    %v96 = vsel %vm91, %v84, 0
    %98 = vmatpush.bf16.msra.mxu0 0
    %99 = vmatpush.bf16.msra.mxu0 0
    %100 = vmatpush.bf16.msra.mxu0 0
    %101 = vmatpush.bf16.msra.mxu0 0
    %102 = vmatpush.bf16.msra.mxu0 0
    %103 = vmatpush.bf16.msra.mxu0 0
    %104 = vmatpush.bf16.msra.mxu0 0
    %105 = vmatpush.bf16.msra.mxu0 %v89
    %106 = vmatmul.bf16.gmra.mxu0 %v93
    %v107 = vpop.f32.mrf.mxu0
    %v108 = vadd.f32 %v75, %v107
    %v109 = vpop.f32.mrf.mxu0
    %v110 = vadd.f32 %v75, %v109
    %111 = vmatmul.bf16.gmra.mxu0 %v96
    %v112 = vpop.f32.mrf.mxu0
    %v113 = vadd.f32 %v75, %v112
    %v114 = vpop.f32.mrf.mxu0
    %115 = vdwg.mxu0
    %v116 = vmax.f32 %v108, 0.0
    %v117 = vmax.f32 %v110, 0.0
    %v118 = vmax.f32 %v113, 0.0
    %v119 = vpack.c.bf16 %v117, %v116
    %v120 = vpack.c.bf16 %v118, %v118
    %v121 = vld [vmem:[%s5] sm:$0xf]
    %v122 = vld [vmem:[%s5 + $0x4] sm:$0xf]
    %v123 = vld [vmem:[%s5 + $0x8] sm:$0xf]
    %v124 = vld [vmem:[%s5 + $0xc] sm:$0xf]
    %v129 = vunpack.c.l.b16 %v121
    %v130 = vunpack.c.l.b16 %v122
    %v131 = vunpack.c.l.b16 %v123
    %v132 = vunpack.c.l.b16 %v124
    %v133 = vpack.c.b16 %v130, %v129
    %v134 = vpack.c.b16 %v132, %v131
    %vm137 = vcmask 261120
    %v139 = vsel %vm137, %v119, 0
    %v142 = vsel %vm137, %v120, 0
    %144 = vmatpush.bf16.msra.mxu0 0
    %145 = vmatpush.bf16.msra.mxu0 0
    %146 = vmatpush.bf16.msra.mxu0 0
    %147 = vmatpush.bf16.msra.mxu0 0
    %148 = vmatpush.bf16.msra.mxu0 0
    %149 = vmatpush.bf16.msra.mxu0 0
    %150 = vmatpush.bf16.msra.mxu0 %v134
    %151 = vmatpush.bf16.msra.mxu0 %v133
    %152 = vmatmul.bf16.gmra.mxu0 %v139
    %v153 = vpop.f32.mrf.mxu0
    %v154 = vadd.f32 0.0, %v153
    %v155 = vpop.f32.mrf.mxu0
    %v156 = vadd.f32 0.0, %v155
    %157 = vmatmul.bf16.gmra.mxu0 %v142
    %v158 = vpop.f32.mrf.mxu0
    %v159 = vadd.f32 0.0, %v158
    %v160 = vpop.f32.mrf.mxu0
    %161 = vdwg.mxu0
    %v162 = vpack.c.bf16 %v156, %v154
    %v163 = vpack.c.bf16 %v159, %v159
    %v164 = vld [vmem:[%s6] sm:$0x1]
    %v166 = vperm.slane %v164, 0
    %v171 = vunpack.c.l.b16 %v64
    %v172 = vunpack.c.l.b16 %v65
    %v173 = vunpack.c.l.b16 %v66
    %v174 = vpack.c.b16 %v172, %v171
    %v175 = vpack.c.b16 %v173, %v173
    %vm176 = vcmask 195584
    %v178 = vsel %vm176, %v174, 0
    %v181 = vsel %vm176, %v175, 0
    %vm183 = vcmask 1043456
    %v185 = vsel %vm183, %v163, 0
    %187 = vmatpush.bf16.msra.mxu0 0
    %188 = vmatpush.bf16.msra.mxu0 0
    %189 = vmatpush.bf16.msra.mxu0 0
    %190 = vmatpush.bf16.msra.mxu0 0
    %191 = vmatpush.bf16.msra.mxu0 0
    %192 = vmatpush.bf16.msra.mxu0 0
    %193 = vmatpush.bf16.msra.mxu0 %v185
    %194 = vmatpush.bf16.msra.mxu0 %v162
    %195 = vmatmul.bf16.gmra.mxu0 %v178
    %v196 = vpop.f32.mrf.mxu0
    %v197 = vadd.f32 %v166, %v196
    %v198 = vpop.f32.mrf.mxu0
    %v199 = vadd.f32 %v166, %v198
    %200 = vmatmul.bf16.gmra.mxu0 %v181
    %v201 = vpop.f32.mrf.mxu0
    %v202 = vadd.f32 %v166, %v201
    %v203 = vpop.f32.mrf.mxu0
    %204 = vdwg.mxu0
    %v205 = vmax.f32 %v197, 0.0
    %v206 = vmax.f32 %v199, 0.0
    %v207 = vmax.f32 %v202, 0.0
    %v208 = vpack.c.bf16 %v206, %v205
    %v209 = vpack.c.bf16 %v207, %v207
    %v211 = vsel %vm176, %v67, 0
    %v214 = vsel %vm183, %v209, 0
    %216 = vmatpush.bf16.msra.mxu0 0
    %217 = vmatpush.bf16.msra.mxu0 0
    %218 = vmatpush.bf16.msra.mxu0 0
    %219 = vmatpush.bf16.msra.mxu0 0
    %220 = vmatpush.bf16.msra.mxu0 0
    %221 = vmatpush.bf16.msra.mxu0 0
    %222 = vmatpush.bf16.msra.mxu0 %v214
    %223 = vmatpush.bf16.msra.mxu0 %v208
    %224 = vmatmul.bf16.gmra.mxu0 %v211
    %v225 = vpop.f32.mrf.mxu0
    %v226 = vadd.f32 0.0, %v225
    %v227 = vpop.f32.mrf.mxu0
    %228 = vdwg.mxu0
    %v229 = vld [vmem:[%s7] sm:$0x1]
    %v231 = vperm.slane %v229, 0
    %v233 = vmul.f32 %v226, %v231
    %v234 = vld [vmem:[%s8] sm:$0x1]
    %v236 = vperm.slane %v234, 0
    %v238 = vadd.f32 %v233, %v236
    %v239 = vmax.f32 %v238, 0.0
    %v240 = vld [vmem:[%s17] sm:$0xff]
    %v241 = vld [vmem:[%s17 + $0x8] sm:$0xff]
    %v242 = vld [vmem:[%s17 + $0x10] sm:$0xff]
    %v243 = vld [vmem:[%s17 + $0x18] sm:$0xff]
    %v244 = vld [vmem:[%s9] sm:$0xf]
    %v245 = vld [vmem:[%s9 + $0x4] sm:$0xf]
    %v246 = vld [vmem:[%s9 + $0x8] sm:$0xf]
    %v247 = vld [vmem:[%s9 + $0xc] sm:$0xf]
    %v252 = vunpack.c.l.b16 %v244
    %v253 = vunpack.c.l.b16 %v245
    %v254 = vunpack.c.l.b16 %v246
    %v255 = vunpack.c.l.b16 %v247
    %v256 = vpack.c.b16 %v253, %v252
    %v257 = vpack.c.b16 %v255, %v254
    %v261 = vsel %vm137, %v208, 0
    %v263 = vsel %vm137, %v209, 0
    %265 = vmatpush.bf16.msra.mxu0 0
    %266 = vmatpush.bf16.msra.mxu0 0
    %267 = vmatpush.bf16.msra.mxu0 0
    %268 = vmatpush.bf16.msra.mxu0 0
    %269 = vmatpush.bf16.msra.mxu0 0
    %270 = vmatpush.bf16.msra.mxu0 0
    %271 = vmatpush.bf16.msra.mxu0 %v257
    %272 = vmatpush.bf16.msra.mxu0 %v256
    %273 = vmatmul.bf16.gmra.mxu0 %v261
    %v274 = vpop.f32.mrf.mxu0
    %v275 = vadd.f32 0.0, %v274
    %v276 = vpop.f32.mrf.mxu0
    %v277 = vadd.f32 0.0, %v276
    %278 = vmatmul.bf16.gmra.mxu0 %v263
    %v279 = vpop.f32.mrf.mxu0
    %v280 = vadd.f32 0.0, %v279
    %v281 = vpop.f32.mrf.mxu0
    %282 = vdwg.mxu0
    %v283 = vpack.c.bf16 %v277, %v275
    %v284 = vpack.c.bf16 %v280, %v280
    %v285 = vld [vmem:[%s10] sm:$0x1]
    %v287 = vperm.slane %v285, 0
    %v290 = vsel %vm183, %v284, 0
    %292 = vmatpush.bf16.msra.mxu0 0
    %293 = vmatpush.bf16.msra.mxu0 0
    %294 = vmatpush.bf16.msra.mxu0 0
    %295 = vmatpush.bf16.msra.mxu0 0
    %296 = vmatpush.bf16.msra.mxu0 0
    %297 = vmatpush.bf16.msra.mxu0 0
    %298 = vmatpush.bf16.msra.mxu0 %v290
    %299 = vmatpush.bf16.msra.mxu0 %v283
    %300 = vmatmul.bf16.gmra.mxu0 %v178
    %v301 = vpop.f32.mrf.mxu0
    %v302 = vadd.f32 %v287, %v301
    %v303 = vpop.f32.mrf.mxu0
    %v304 = vadd.f32 %v287, %v303
    %305 = vmatmul.bf16.gmra.mxu0 %v181
    %v306 = vpop.f32.mrf.mxu0
    %v307 = vadd.f32 %v287, %v306
    %v308 = vpop.f32.mrf.mxu0
    %309 = vdwg.mxu0
    %v310 = vmax.f32 %v302, 0.0
    %v311 = vmax.f32 %v304, 0.0
    %v312 = vmax.f32 %v307, 0.0
    %v313 = vpack.c.bf16 %v311, %v310
    %v314 = vpack.c.bf16 %v312, %v312
    %v316 = vsel %vm183, %v314, 0
    %318 = vmatpush.bf16.msra.mxu0 0
    %319 = vmatpush.bf16.msra.mxu0 0
    %320 = vmatpush.bf16.msra.mxu0 0
    %321 = vmatpush.bf16.msra.mxu0 0
    %322 = vmatpush.bf16.msra.mxu0 0
    %323 = vmatpush.bf16.msra.mxu0 0
    %324 = vmatpush.bf16.msra.mxu0 %v316
    %325 = vmatpush.bf16.msra.mxu0 %v313
    %326 = vmatmul.bf16.gmra.mxu0 %v211
    %v327 = vpop.f32.mrf.mxu0
    %v328 = vadd.f32 0.0, %v327
    %v329 = vpop.f32.mrf.mxu0
    %330 = vdwg.mxu0
    %v331 = vld [vmem:[%s11] sm:$0x1]
    %v333 = vperm.slane %v331, 0
    %v335 = vmul.f32 %v328, %v333
    %v336 = vld [vmem:[%s12] sm:$0x1]
    %v338 = vperm.slane %v336, 0
    %v340 = vadd.f32 %v335, %v338
    %v341 = vmax.f32 %v340, 0.0
    %v342 = vld [vmem:[%s17 + $0x20] sm:$0xff]
    %v343 = vld [vmem:[%s17 + $0x28] sm:$0xff]
    %v344 = vld [vmem:[%s17 + $0x30] sm:$0xff]
    %v345 = vld [vmem:[%s17 + $0x38] sm:$0xff]
    %v347 = vsel %vm137, %v341, 0
    %349 = vmatpush.msra.mxu0 0.0
    %350 = vmatpush.msra.mxu0 0.0
    %351 = vmatpush.msra.mxu0 0.0
    %352 = vmatpush.msra.mxu0 0.0
    %353 = vmatpush.msra.mxu0 0.0
    %354 = vmatpush.msra.mxu0 0.0
    %355 = vmatpush.msra.mxu0 0.0
    %356 = vmatpush.msra.mxu0 0.0
    %357 = vmatpush.msra.mxu0 0.0
    %358 = vmatpush.msra.mxu0 0.0
    %359 = vmatpush.msra.mxu0 0.0
    %360 = vmatpush.msra.mxu0 0.0
    %361 = vmatpush.msra.mxu0 %v345
    %362 = vmatpush.msra.mxu0 %v344
    %363 = vmatpush.msra.mxu0 %v343
    %364 = vmatpush.msra.mxu0 %v342
    %365 = vmatmul.f32.gmra.mxu0 %v347
    %v366 = vpop.f32.mrf.mxu0
    %v367 = vadd.f32 0.0, %v366
    %368 = vdwg.mxu0
    %v370 = vsel %vm137, %v239, 0
    %372 = vmatpush.msra.mxu0 0.0
    %373 = vmatpush.msra.mxu0 0.0
    %374 = vmatpush.msra.mxu0 0.0
    %375 = vmatpush.msra.mxu0 0.0
    %376 = vmatpush.msra.mxu0 0.0
    %377 = vmatpush.msra.mxu0 0.0
    %378 = vmatpush.msra.mxu0 0.0
    %379 = vmatpush.msra.mxu0 0.0
    %380 = vmatpush.msra.mxu0 0.0
    %381 = vmatpush.msra.mxu0 0.0
    %382 = vmatpush.msra.mxu0 0.0
    %383 = vmatpush.msra.mxu0 0.0
    %384 = vmatpush.msra.mxu0 %v243
    %385 = vmatpush.msra.mxu0 %v242
    %386 = vmatpush.msra.mxu0 %v241
    %387 = vmatpush.msra.mxu0 %v240
    %388 = vmatmul.f32.gmra.mxu0 %v370
    %v389 = vpop.f32.mrf.mxu0
    %v390 = vadd.f32 %v367, %v389
    %391 = vdwg.mxu0
    %v392 = vld [vmem:[%s13] sm:$0xf]
    %v393 = vld [vmem:[%s13 + $0x4] sm:$0xf]
    %v394 = vld [vmem:[%s13 + $0x8] sm:$0xf]
    %v395 = vld [vmem:[%s13 + $0xc] sm:$0xf]
    %v400 = vunpack.c.l.b16 %v392
    %v401 = vunpack.c.l.b16 %v393
    %v402 = vunpack.c.l.b16 %v394
    %v403 = vunpack.c.l.b16 %v395
    %v404 = vpack.c.b16 %v401, %v400
    %v405 = vpack.c.b16 %v403, %v402
    %v409 = vsel %vm137, %v313, 0
    %v411 = vsel %vm137, %v314, 0
    %413 = vmatpush.bf16.msra.mxu0 0
    %414 = vmatpush.bf16.msra.mxu0 0
    %415 = vmatpush.bf16.msra.mxu0 0
    %416 = vmatpush.bf16.msra.mxu0 0
    %417 = vmatpush.bf16.msra.mxu0 0
    %418 = vmatpush.bf16.msra.mxu0 0
    %419 = vmatpush.bf16.msra.mxu0 %v405
    %420 = vmatpush.bf16.msra.mxu0 %v404
    %421 = vmatmul.bf16.gmra.mxu0 %v409
    %v422 = vpop.f32.mrf.mxu0
    %v423 = vadd.f32 0.0, %v422
    %v424 = vpop.f32.mrf.mxu0
    %v425 = vadd.f32 0.0, %v424
    %426 = vmatmul.bf16.gmra.mxu0 %v411
    %v427 = vpop.f32.mrf.mxu0
    %v428 = vadd.f32 0.0, %v427
    %v429 = vpop.f32.mrf.mxu0
    %430 = vdwg.mxu0
    %v431 = vpack.c.bf16 %v425, %v423
    %v432 = vpack.c.bf16 %v428, %v428
    %v433 = vld [vmem:[%s14] sm:$0x1]
    %v435 = vperm.slane %v433, 0
    %v438 = vsel %vm183, %v432, 0
    %440 = vmatpush.bf16.msra.mxu0 0
    %441 = vmatpush.bf16.msra.mxu0 0
    %442 = vmatpush.bf16.msra.mxu0 0
    %443 = vmatpush.bf16.msra.mxu0 0
    %444 = vmatpush.bf16.msra.mxu0 0
    %445 = vmatpush.bf16.msra.mxu0 0
    %446 = vmatpush.bf16.msra.mxu0 %v438
    %447 = vmatpush.bf16.msra.mxu0 %v431
    %448 = vmatmul.bf16.gmra.mxu0 %v178
    %v449 = vpop.f32.mrf.mxu0
    %v450 = vadd.f32 %v435, %v449
    %v451 = vpop.f32.mrf.mxu0
    %v452 = vadd.f32 %v435, %v451
    %453 = vmatmul.bf16.gmra.mxu0 %v181
    %v454 = vpop.f32.mrf.mxu0
    %v455 = vadd.f32 %v435, %v454
    %v456 = vpop.f32.mrf.mxu0
    %457 = vdwg.mxu0
    %v458 = vmax.f32 %v450, 0.0
    %v459 = vmax.f32 %v452, 0.0
    %v460 = vmax.f32 %v455, 0.0
    %v461 = vpack.c.bf16 %v459, %v458
    %v462 = vpack.c.bf16 %v460, %v460
    %v464 = vsel %vm183, %v462, 0
    %466 = vmatpush.bf16.msra.mxu0 0
    %467 = vmatpush.bf16.msra.mxu0 0
    %468 = vmatpush.bf16.msra.mxu0 0
    %469 = vmatpush.bf16.msra.mxu0 0
    %470 = vmatpush.bf16.msra.mxu0 0
    %471 = vmatpush.bf16.msra.mxu0 0
    %472 = vmatpush.bf16.msra.mxu0 %v464
    %473 = vmatpush.bf16.msra.mxu0 %v461
    %474 = vmatmul.bf16.gmra.mxu0 %v211
    %v475 = vpop.f32.mrf.mxu0
    %v476 = vadd.f32 0.0, %v475
    %v477 = vpop.f32.mrf.mxu0
    %478 = vdwg.mxu0
    %v479 = vld [vmem:[%s15] sm:$0x1]
    %v481 = vperm.slane %v479, 0
    %v483 = vmul.f32 %v476, %v481
    %v484 = vld [vmem:[%s16] sm:$0x1]
    %v486 = vperm.slane %v484, 0
    %v488 = vadd.f32 %v483, %v486
    %v489 = vmax.f32 %v488, 0.0
    %v490 = vld [vmem:[%s17 + $0x40] sm:$0xff]
    %v491 = vld [vmem:[%s17 + $0x48] sm:$0xff]
    %v492 = vld [vmem:[%s17 + $0x50] sm:$0xff]
    %v493 = vld [vmem:[%s17 + $0x58] sm:$0xff]
    %v495 = vsel %vm137, %v489, 0
    %497 = vmatpush.msra.mxu0 0.0
    %498 = vmatpush.msra.mxu0 0.0
    %499 = vmatpush.msra.mxu0 0.0
    %500 = vmatpush.msra.mxu0 0.0
    %501 = vmatpush.msra.mxu0 0.0
    %502 = vmatpush.msra.mxu0 0.0
    %503 = vmatpush.msra.mxu0 0.0
    %504 = vmatpush.msra.mxu0 0.0
    %505 = vmatpush.msra.mxu0 0.0
    %506 = vmatpush.msra.mxu0 0.0
    %507 = vmatpush.msra.mxu0 0.0
    %508 = vmatpush.msra.mxu0 0.0
    %509 = vmatpush.msra.mxu0 %v493
    %510 = vmatpush.msra.mxu0 %v492
    %511 = vmatpush.msra.mxu0 %v491
    %512 = vmatpush.msra.mxu0 %v490
    %513 = vmatmul.f32.gmra.mxu0 %v495
    %v514 = vpop.f32.mrf.mxu0
    %v515 = vadd.f32 0.0, %v514
    %516 = vdwg.mxu0
    %v517 = vadd.f32 %v390, %v515
    %v518 = vld [vmem:[%s18] sm:$0x1]
    %v520 = vperm.slane %v518, 0
    %v522 = vadd.f32 %v517, %v520
    %vm523 = vcmask 26624
    %524 = vst.msk [vmem:[#allocation2] sm:$0x7] %vm523, %v522
    // Predicated region
    $region78: #{tpu_custom_call.1} parent=1 // pred_check
      _
    $region79: #{tpu_custom_call.1} parent=1 // pred_check_branch
      %526 = sbr.rel (0) target = $region81
    $region80: #{tpu_custom_call.1} parent=1 // pred_region
      %528 = vsyncadd [#allocation3], 0
      %s530 = sshll.u32 [#allocation2], 4
      %s531 = int_to_ptr.vmem [resolvable:$true] %s530
      %s532 = sshll.u32 %s19, 4
      %s533 = int_to_ptr.hbm [resolvable:$true] %s532
      %535 = dma.vmem_to_hbm [thread:$0]  %s531, 64, %s533, [#allocation3]
    $region81: #{tpu_custom_call.1} parent=1 // pred_fallthru
      _
    // Predicated region
    $region82: #{tpu_custom_call.1} parent=1 // pred_check
      _
    $region83: #{tpu_custom_call.1} parent=1 // pred_check_branch
      %537 = sbr.rel (0) target = $region85
    $region84: #{tpu_custom_call.1} parent=1 // pred_region
      %539 = dma.done [#allocation3], 64
    $region85: #{tpu_custom_call.1} parent=1 // pred_fallthru
      _
    %540 = vsyncpa [#allocation3], 1

</llo_original>
